<compile_context>
chip_gen: v5e
topology: v5e:2x2
jax: 0.10.0
libtpu: 0.0.40
codegen_flags: <defaults>
</compile_context>

<pallas_src>
import functools

import jax
import jax.numpy as jnp
from jax.experimental import pallas as pl
from jax.experimental.pallas import tpu as pltpu

LANE = 128


def _round_up(n, m):
    return ((n + m - 1) // m) * m


def _mlp_softmax_kernel(x_ref, w1_ref, b1_ref, w2_ref, b2_ref, w3_ref, b3_ref,
                        o_ref, *, num_classes):
    x = x_ref[...]

    # fc1 + relu
    h1 = jnp.maximum(
        jnp.dot(x, w1_ref[...], preferred_element_type=jnp.float32) + b1_ref[...], 0.0)
    # fc2 + relu  (padded hidden columns stay exactly 0: relu(0 + 0))
    h2 = jnp.maximum(
        jnp.dot(h1, w2_ref[...], preferred_element_type=jnp.float32) + b2_ref[...], 0.0)
    # fc3 — padded class columns of b3 carry -1e30, so their logits are ~-1e30 and
    # exp() of them underflows to exactly 0 (no iota/where mask needed).
    logits = jnp.dot(h2, w3_ref[...], preferred_element_type=jnp.float32) + b3_ref[...]

    m = jnp.max(logits, axis=1, keepdims=True)
    e = jnp.exp(logits - m)
    denom = jnp.sum(e, axis=1, keepdims=True)
    probs = e / denom                       # exact normalization; denom is (TB, 1)

    # Store only the real class columns -> slim (TB, num_classes) HBM write.
    o_ref[...] = probs[:, :num_classes].astype(o_ref.dtype)


def prepare_params(params):
    """Pad weights ONCE (outside the hot path): feature dims -> 128 lanes; bake the
    softmax class mask into the padded columns of b3 (-1e30)."""
    w1, b1 = params["w1"], params["b1"]
    w2, b2 = params["w2"], params["b2"]
    w3, b3 = params["w3"], params["b3"]
    h1, h2, nc = w1.shape[1], w2.shape[1], w3.shape[1]
    h1p, h2p, ncp = (_round_up(d, LANE) for d in (h1, h2, nc))

    w1p = jnp.pad(w1, ((0, 0), (0, h1p - h1)))
    b1p = jnp.pad(b1, ((0, 0), (0, h1p - h1)))
    w2p = jnp.pad(w2, ((0, h1p - h1), (0, h2p - h2)))
    b2p = jnp.pad(b2, ((0, 0), (0, h2p - h2)))
    w3p = jnp.pad(w3, ((0, h2p - h2), (0, ncp - nc)))
    b3p = jnp.pad(b3, ((0, 0), (0, ncp - nc)), constant_values=-1e30)
    return {"w1": w1p, "b1": b1p, "w2": w2p, "b2": b2p, "w3": w3p, "b3": b3p,
            "num_classes": nc}


def neural_network_forward(x, pp, *, block_batch=2048):
    """x: (B, input_size) float32. pp: output of prepare_params (padded weights)."""
    B, in_size = x.shape
    nc = pp["num_classes"]
    h1p = pp["w1"].shape[1]
    h2p = pp["w2"].shape[1]
    ncp = pp["w3"].shape[1]
    assert pp["w1"].shape[0] == in_size

    # Batch tile: multiple of 8 sublanes, capped at block_batch. A ragged final
    # block (B % TB != 0) is handled by Pallas partial-block masking — no jnp.pad
    # copy of x. (On v7x, keep block_batch small enough that grid >= 2 so the
    # "parallel" batch axis feeds both TensorCores.)
    TB = min(block_batch, _round_up(B, 8))
    grid = (pl.cdiv(B, TB),)

    const = lambda i: (0, 0)   # weights/biases: same block every step -> VMEM-resident

    kernel = functools.partial(_mlp_softmax_kernel, num_classes=nc)

    return pl.pallas_call(
        kernel,
        out_shape=jax.ShapeDtypeStruct((B, nc), jnp.float32),
        grid_spec=pltpu.PrefetchScalarGridSpec(
            num_scalar_prefetch=0,
            grid=grid,
            in_specs=[
                pl.BlockSpec((TB, in_size), lambda i: (i, 0)),   # x: batch-tiled
                pl.BlockSpec((in_size, h1p), const),             # w1
                pl.BlockSpec((1, h1p), const),                   # b1
                pl.BlockSpec((h1p, h2p), const),                 # w2
                pl.BlockSpec((1, h2p), const),                   # b2
                pl.BlockSpec((h2p, ncp), const),                 # w3
                pl.BlockSpec((1, ncp), const),                   # b3
            ],
            # Last dim (nc=4) equals the full array dim -> legal, lane-slim store.
            out_specs=pl.BlockSpec((TB, nc), lambda i: (i, 0)),
        ),
        compiler_params=pltpu.CompilerParams(
            dimension_semantics=("parallel",),      # shard batch grid across TCs (v7x)
            vmem_limit_bytes=32 * 1024 * 1024,      # usage << limit even at TB=8192
        ),
    )(x, pp["w1"], pp["b1"], pp["w2"], pp["b2"], pp["w3"], pp["b3"])


def init_params(key, input_size):
    """Deterministic init mimicking PyTorch nn.Linear default (uniform ±1/sqrt(fan_in))."""
    def linear(key, fan_in, fan_out):
        kw, kb = jax.random.split(key)
        bound = 1.0 / jnp.sqrt(jnp.float32(fan_in))
        # stored as (in, out) so the kernel computes x @ W
        w = jax.random.uniform(kw, (fan_in, fan_out), jnp.float32, -bound, bound)
        b = jax.random.uniform(kb, (1, fan_out), jnp.float32, -bound, bound)
        return w, b

    k1, k2, k3 = jax.random.split(key, 3)
    w1, b1 = linear(k1, input_size, 64)
    w2, b2 = linear(k2, 64, 32)
    w3, b3 = linear(k3, 32, 4)
    return {"w1": w1, "b1": b1, "w2": w2, "b2": b2, "w3": w3, "b3": b3}


def _reference(x, p):
    h1 = jnp.maximum(x @ p["w1"] + p["b1"], 0.0)
    h2 = jnp.maximum(h1 @ p["w2"] + p["b2"], 0.0)
    logits = h2 @ p["w3"] + p["b3"]
    return jax.nn.softmax(logits, axis=1)


if __name__ == "__main__":
    key = jax.random.PRNGKey(0)
    k_in, k_par = jax.random.split(key)

    batch = 8
    input_size = 16
    x = jax.random.normal(k_in, (batch, input_size), dtype=jnp.float32)
    params = init_params(k_par, input_size)
    padded_params = prepare_params(params)     # one-time, outside the hot path

    out = jax.block_until_ready(neural_network_forward(x, padded_params))
    ref = _reference(x, params)

    assert out.shape == (batch, 4)
    assert jnp.allclose(out, ref, atol=1e-4, rtol=1e-4), float(jnp.max(jnp.abs(out - ref)))
    # exact divide in the softmax -> rows sum to 1 at fp32 precision
    assert jnp.allclose(jnp.sum(out, axis=1), jnp.ones((batch,)), atol=1e-5)

    print("KERNEL_OK")
</pallas_src>

<mosaic_0001>
module attributes {stable_mosaic.version = 11 : i64} {
  func.func @_mlp_softmax_kernel(%arg0: i32, %arg1: memref<8x16xf32, #tpu.memory_space<vmem>>, %arg2: memref<16x128xf32, #tpu.memory_space<vmem>>, %arg3: memref<1x128xf32, #tpu.memory_space<vmem>>, %arg4: memref<128x128xf32, #tpu.memory_space<vmem>>, %arg5: memref<1x128xf32, #tpu.memory_space<vmem>>, %arg6: memref<128x128xf32, #tpu.memory_space<vmem>>, %arg7: memref<1x128xf32, #tpu.memory_space<vmem>>, %arg8: memref<8x4xf32, #tpu.memory_space<vmem>>) attributes {dimension_semantics = [#tpu.dimension_semantics<parallel>], iteration_bounds = array<i64: 1>, scalar_prefetch = 0 : i64, scratch_operands = 0 : i64, tpu.core_type = #tpu.core_type<tc>, window_params = [{transform_indices = @transform_0, window_bounds = array<i64: 8, 16>}, {pipeline_mode = #tpu.pipeline_mode<synchronous>, transform_indices = @transform_1, window_bounds = array<i64: 16, 128>}, {pipeline_mode = #tpu.pipeline_mode<synchronous>, transform_indices = @transform_2, window_bounds = array<i64: 1, 128>}, {pipeline_mode = #tpu.pipeline_mode<synchronous>, transform_indices = @transform_3, window_bounds = array<i64: 128, 128>}, {pipeline_mode = #tpu.pipeline_mode<synchronous>, transform_indices = @transform_4, window_bounds = array<i64: 1, 128>}, {pipeline_mode = #tpu.pipeline_mode<synchronous>, transform_indices = @transform_5, window_bounds = array<i64: 128, 128>}, {pipeline_mode = #tpu.pipeline_mode<synchronous>, transform_indices = @transform_6, window_bounds = array<i64: 1, 128>}, {transform_indices = @transform_7, window_bounds = array<i64: 8, 4>}]} {
    %c0 = arith.constant 0 : index
    %c0_0 = arith.constant 0 : index
    %0 = vector.load %arg1[%c0, %c0_0] : memref<8x16xf32, #tpu.memory_space<vmem>>, vector<8x16xf32>
    %c0_1 = arith.constant 0 : index
    %c0_2 = arith.constant 0 : index
    %1 = vector.load %arg2[%c0_1, %c0_2] : memref<16x128xf32, #tpu.memory_space<vmem>>, vector<16x128xf32>
    %cst = arith.constant dense<0.000000e+00> : vector<8x128xf32>
    %2 = tpu.matmul %0, %1, %cst {dimension_numbers = #tpu.dot_dimension_numbers<[1], [0], [0], [1], [0, 0, 1, 1], [], []>} : vector<8x16xf32>, vector<16x128xf32>, vector<8x128xf32> -> vector<8x128xf32>
    %c0_3 = arith.constant 0 : index
    %c0_4 = arith.constant 0 : index
    %3 = vector.load %arg3[%c0_3, %c0_4] : memref<1x128xf32, #tpu.memory_space<vmem>>, vector<1x128xf32>
    %4 = vector.broadcast %3 : vector<1x128xf32> to vector<8x128xf32>
    %5 = arith.addf %2, %4 : vector<8x128xf32>
    %cst_5 = arith.constant 0.000000e+00 : f32
    %6 = vector.broadcast %cst_5 : f32 to vector<8x128xf32>
    %7 = arith.maximumf %5, %6 : vector<8x128xf32>
    %c0_6 = arith.constant 0 : index
    %c0_7 = arith.constant 0 : index
    %8 = vector.load %arg4[%c0_6, %c0_7] : memref<128x128xf32, #tpu.memory_space<vmem>>, vector<128x128xf32>
    %cst_8 = arith.constant dense<0.000000e+00> : vector<8x128xf32>
    %9 = tpu.matmul %7, %8, %cst_8 {dimension_numbers = #tpu.dot_dimension_numbers<[1], [0], [0], [1], [0, 0, 1, 1], [], []>} : vector<8x128xf32>, vector<128x128xf32>, vector<8x128xf32> -> vector<8x128xf32>
    %c0_9 = arith.constant 0 : index
    %c0_10 = arith.constant 0 : index
    %10 = vector.load %arg5[%c0_9, %c0_10] : memref<1x128xf32, #tpu.memory_space<vmem>>, vector<1x128xf32>
    %11 = vector.broadcast %10 : vector<1x128xf32> to vector<8x128xf32>
    %12 = arith.addf %9, %11 : vector<8x128xf32>
    %cst_11 = arith.constant 0.000000e+00 : f32
    %13 = vector.broadcast %cst_11 : f32 to vector<8x128xf32>
    %14 = arith.maximumf %12, %13 : vector<8x128xf32>
    %c0_12 = arith.constant 0 : index
    %c0_13 = arith.constant 0 : index
    %15 = vector.load %arg6[%c0_12, %c0_13] : memref<128x128xf32, #tpu.memory_space<vmem>>, vector<128x128xf32>
    %cst_14 = arith.constant dense<0.000000e+00> : vector<8x128xf32>
    %16 = tpu.matmul %14, %15, %cst_14 {dimension_numbers = #tpu.dot_dimension_numbers<[1], [0], [0], [1], [0, 0, 1, 1], [], []>} : vector<8x128xf32>, vector<128x128xf32>, vector<8x128xf32> -> vector<8x128xf32>
    %c0_15 = arith.constant 0 : index
    %c0_16 = arith.constant 0 : index
    %17 = vector.load %arg7[%c0_15, %c0_16] : memref<1x128xf32, #tpu.memory_space<vmem>>, vector<1x128xf32>
    %18 = vector.broadcast %17 : vector<1x128xf32> to vector<8x128xf32>
    %19 = arith.addf %16, %18 : vector<8x128xf32>
    %cst_17 = arith.constant dense<0xFF800000> : vector<8xf32>
    %20 = vector.multi_reduction <maximumf>, %19, %cst_17 [1] : vector<8x128xf32> to vector<8xf32>
    %21 = vector.shape_cast %20 : vector<8xf32> to vector<8x1xf32>
    %22 = vector.broadcast %21 : vector<8x1xf32> to vector<8x128xf32>
    %23 = arith.subf %19, %22 : vector<8x128xf32>
    %24 = math.exp %23 : vector<8x128xf32>
    %cst_18 = arith.constant dense<0.000000e+00> : vector<8xf32>
    %25 = vector.multi_reduction <add>, %24, %cst_18 [1] : vector<8x128xf32> to vector<8xf32>
    %26 = vector.shape_cast %25 : vector<8xf32> to vector<8x1xf32>
    %27 = vector.broadcast %26 : vector<8x1xf32> to vector<8x128xf32>
    %28 = arith.divf %24, %27 : vector<8x128xf32>
    %29 = vector.extract_strided_slice %28 {offsets = [0, 0], sizes = [8, 4], strides = [1, 1]} : vector<8x128xf32> to vector<8x4xf32>
    %c0_19 = arith.constant 0 : index
    %c0_20 = arith.constant 0 : index
    %30 = vector.load %arg8[%c0_19, %c0_20] : memref<8x4xf32, #tpu.memory_space<vmem>>, vector<8x4xf32>
    tpu.vector_store %arg8[%c0_19, %c0_20], %29 {strides = array<i32>} : memref<8x4xf32, #tpu.memory_space<vmem>>, vector<8x4xf32>,
    return
  }
  func.func @transform_0(%arg0: i32) -> (i32, i32) {
    %c0_i32 = arith.constant 0 : i32
    %c0_i32_0 = arith.constant 0 : i32
    return %arg0, %c0_i32 : i32, i32
  }
  func.func @transform_1(%arg0: i32) -> (i32, i32) {
    %c0_i32 = arith.constant 0 : i32
    %c0_i32_0 = arith.constant 0 : i32
    %c0_i32_1 = arith.constant 0 : i32
    return %c0_i32, %c0_i32_0 : i32, i32
  }
  func.func @transform_2(%arg0: i32) -> (i32, i32) {
    %c0_i32 = arith.constant 0 : i32
    %c0_i32_0 = arith.constant 0 : i32
    %c0_i32_1 = arith.constant 0 : i32
    return %c0_i32, %c0_i32_0 : i32, i32
  }
  func.func @transform_3(%arg0: i32) -> (i32, i32) {
    %c0_i32 = arith.constant 0 : i32
    %c0_i32_0 = arith.constant 0 : i32
    %c0_i32_1 = arith.constant 0 : i32
    return %c0_i32, %c0_i32_0 : i32, i32
  }
  func.func @transform_4(%arg0: i32) -> (i32, i32) {
    %c0_i32 = arith.constant 0 : i32
    %c0_i32_0 = arith.constant 0 : i32
    %c0_i32_1 = arith.constant 0 : i32
    return %c0_i32, %c0_i32_0 : i32, i32
  }
  func.func @transform_5(%arg0: i32) -> (i32, i32) {
    %c0_i32 = arith.constant 0 : i32
    %c0_i32_0 = arith.constant 0 : i32
    %c0_i32_1 = arith.constant 0 : i32
    return %c0_i32, %c0_i32_0 : i32, i32
  }
  func.func @transform_6(%arg0: i32) -> (i32, i32) {
    %c0_i32 = arith.constant 0 : i32
    %c0_i32_0 = arith.constant 0 : i32
    %c0_i32_1 = arith.constant 0 : i32
    return %c0_i32, %c0_i32_0 : i32, i32
  }
  func.func @transform_7(%arg0: i32) -> (i32, i32) {
    %c0_i32 = arith.constant 0 : i32
    %c0_i32_0 = arith.constant 0 : i32
    return %arg0, %c0_i32 : i32, i32
  }
}

</mosaic_0001>

<llo_original>
// kernel: tpu_custom_call.1
$region0: #{tpu_custom_call.1}
  #allocation0 [shape = 'u32[]', space=smem, size = 0x4, offset = 0x4, fixed_abs, tag = 'smem constant byte address 0x4 - core index']
  #allocation1 [shape = 'u32[72,128]{1,0:T(1,128)}', space=vmem, size = 0x9000, scoped, tag = 'internal scratch']
  %s0 = inlined_call_operand.hbm [shape: f32[8,16], index: 0, kind: input, shape index: {}]
  %s1 = inlined_call_operand.hbm [shape: f32[16,128], index: 1, kind: input, shape index: {}]
  %s2 = inlined_call_operand.vmem [shape: f32[1,128], index: 2, kind: input, shape index: {}]
  %s3 = inlined_call_operand.hbm [shape: f32[128,128], index: 3, kind: input, shape index: {}]
  %s4 = inlined_call_operand.vmem [shape: f32[1,128], index: 4, kind: input, shape index: {}]
  %s5 = inlined_call_operand.hbm [shape: f32[128,128], index: 5, kind: input, shape index: {}]
  %s6 = inlined_call_operand.vmem [shape: f32[1,128], index: 6, kind: input, shape index: {}]
  %s7 = inlined_call_operand.vmem [shape: f32[8,4], index: 7, kind: output, shape index: {}]
  %s8 = sld [smem:[#allocation0]]
  $region54: #{tpu_custom_call.1} parent=0
    _
  %s10 = ssub.s32 1, %s8
  %s11 = scalar_select 0, %s10, %s8
  $region1: #{tpu_custom_call.1} parent=0
    #allocation2 [shape = 'u8[4096]{0}', space=vmem, size = 0x1000, scoped, tag = 'input window, operand 0, single buffered']
    #allocation3 [shape = 's32[1]{0}', space=sflag, size = 0x4, scoped, tag = 'scoped memory for tpu_custom_call.1']
    #allocation4 [shape = 'u8[8192]{0}', space=vmem, size = 0x2000, scoped, tag = 'input window, operand 1, single buffered']
    #allocation5 [shape = 's32[1]{0}', space=sflag, size = 0x4, scoped, tag = 'scoped memory for tpu_custom_call.1']
    #allocation6 [shape = 'u8[65536]{0}', space=vmem, size = 0x10000, scoped, tag = 'input window, operand 3, single buffered']
    #allocation7 [shape = 'u8[65536]{0}', space=vmem, size = 0x10000, scoped, tag = 'input window, operand 5, single buffered']
    #allocation8 [shape = 's32[1]{0}', space=sflag, size = 0x4, scoped, tag = 'scoped memory for tpu_custom_call.1']
    %12 = vsyncpa [#allocation3], 0
    %13 = vsyncpa [#allocation5], 0
    %14 = vsyncpa [#allocation8], 0
    // Predicated region
    $region2: #{tpu_custom_call.1} parent=1 // pred_check
      _
    $region3: #{tpu_custom_call.1} parent=1 // pred_check_branch
      %16 = sbr.rel (0) target = $region5
    $region4: #{tpu_custom_call.1} parent=1 // pred_region
      %18 = vsyncadd [#allocation3], 0
      %s20 = sshll.u32 %s0, 4
      %s21 = int_to_ptr.hbm [resolvable:$true] %s20
      %s22 = sshll.u32 [#allocation2], 4
      %s23 = int_to_ptr.vmem [resolvable:$true] %s22
      %25 = dma.hbm_to_vmem [thread:$0]  %s21, 128, %s23, [#allocation3]
    $region5: #{tpu_custom_call.1} parent=1 // pred_fallthru
      _
    // Predicated region
    $region6: #{tpu_custom_call.1} parent=1 // pred_check
      _
    $region7: #{tpu_custom_call.1} parent=1 // pred_check_branch
      %27 = sbr.rel (0) target = $region9
    $region8: #{tpu_custom_call.1} parent=1 // pred_region
      %29 = vsyncadd [#allocation5], 0
      %s30 = sshll.u32 %s1, 4
      %s31 = int_to_ptr.hbm [resolvable:$true] %s30
      %s32 = sshll.u32 [#allocation4], 4
      %s33 = int_to_ptr.vmem [resolvable:$true] %s32
      %38 = dma.hbm_to_vmem [thread:$0]  %s31, 256, %s33, [#allocation5], 128, 128, 8
    $region9: #{tpu_custom_call.1} parent=1 // pred_fallthru
      _
    // Predicated region
    $region10: #{tpu_custom_call.1} parent=1 // pred_check
      _
    $region11: #{tpu_custom_call.1} parent=1 // pred_check_branch
      %40 = sbr.rel (0) target = $region13
    $region12: #{tpu_custom_call.1} parent=1 // pred_region
      _
    $region13: #{tpu_custom_call.1} parent=1 // pred_fallthru
      _
    // Predicated region
    $region14: #{tpu_custom_call.1} parent=1 // pred_check
      _
    $region15: #{tpu_custom_call.1} parent=1 // pred_check_branch
      %42 = sbr.rel (0) target = $region17
    $region16: #{tpu_custom_call.1} parent=1 // pred_region
      %44 = vsyncadd [#allocation5], 0
      %s45 = sshll.u32 %s3, 4
      %s46 = int_to_ptr.hbm [resolvable:$true] %s45
      %s47 = sshll.u32 [#allocation6], 4
      %s48 = int_to_ptr.vmem [resolvable:$true] %s47
      %53 = dma.hbm_to_vmem [thread:$0]  %s46, 2048, %s48, [#allocation5], 128, 128, 8
    $region17: #{tpu_custom_call.1} parent=1 // pred_fallthru
      _
    // Predicated region
    $region18: #{tpu_custom_call.1} parent=1 // pred_check
      _
    $region19: #{tpu_custom_call.1} parent=1 // pred_check_branch
      %55 = sbr.rel (0) target = $region21
    $region20: #{tpu_custom_call.1} parent=1 // pred_region
      _
    $region21: #{tpu_custom_call.1} parent=1 // pred_fallthru
      _
    // Predicated region
    $region22: #{tpu_custom_call.1} parent=1 // pred_check
      _
    $region23: #{tpu_custom_call.1} parent=1 // pred_check_branch
      %57 = sbr.rel (0) target = $region25
    $region24: #{tpu_custom_call.1} parent=1 // pred_region
      %59 = vsyncadd [#allocation8], 0
      %s60 = sshll.u32 %s5, 4
      %s61 = int_to_ptr.hbm [resolvable:$true] %s60
      %s62 = sshll.u32 [#allocation7], 4
      %s63 = int_to_ptr.vmem [resolvable:$true] %s62
      %68 = dma.hbm_to_vmem [thread:$0]  %s61, 2048, %s63, [#allocation8], 128, 128, 8
    $region25: #{tpu_custom_call.1} parent=1 // pred_fallthru
      _
    // Predicated region
    $region26: #{tpu_custom_call.1} parent=1 // pred_check
      _
    $region27: #{tpu_custom_call.1} parent=1 // pred_check_branch
      %70 = sbr.rel (0) target = $region29
    $region28: #{tpu_custom_call.1} parent=1 // pred_region
      _
    $region29: #{tpu_custom_call.1} parent=1 // pred_fallthru
      _
    // Predicated region
    $region30: #{tpu_custom_call.1} parent=1 // pred_check
      _
    $region31: #{tpu_custom_call.1} parent=1 // pred_check_branch
      %72 = sbr.rel (0) target = $region33
    $region32: #{tpu_custom_call.1} parent=1 // pred_region
      %74 = dma.done [#allocation3], 128
    $region33: #{tpu_custom_call.1} parent=1 // pred_fallthru
      _
    // Predicated region
    $region34: #{tpu_custom_call.1} parent=1 // pred_check
      _
    $region35: #{tpu_custom_call.1} parent=1 // pred_check_branch
      %76 = sbr.rel (0) target = $region37
    $region36: #{tpu_custom_call.1} parent=1 // pred_region
      %78 = dma.done [#allocation5], 256
    $region37: #{tpu_custom_call.1} parent=1 // pred_fallthru
      _
    // Predicated region
    $region38: #{tpu_custom_call.1} parent=1 // pred_check
      _
    $region39: #{tpu_custom_call.1} parent=1 // pred_check_branch
      %80 = sbr.rel (0) target = $region41
    $region40: #{tpu_custom_call.1} parent=1 // pred_region
      %82 = dma.done [#allocation5], 2048
    $region41: #{tpu_custom_call.1} parent=1 // pred_fallthru
      _
    // Predicated region
    $region42: #{tpu_custom_call.1} parent=1 // pred_check
      _
    $region43: #{tpu_custom_call.1} parent=1 // pred_check_branch
      %84 = sbr.rel (0) target = $region45
    $region44: #{tpu_custom_call.1} parent=1 // pred_region
      %86 = dma.done [#allocation8], 2048
    $region45: #{tpu_custom_call.1} parent=1 // pred_fallthru
      _
    %v87 = vld [vmem:[#allocation2] sm:$0xff]
    %v88 = vld [vmem:[#allocation4] sm:$0xff]
    %v89 = vld [vmem:[#allocation4 + $0x8] sm:$0xff]
    %v90 = vld [vmem:[%s2] sm:$0x1]
    %v92 = vperm.slane %v90, 0
    %vm94 = vcmask 130048
    %v96 = vsel %vm94, %v87, 0
    %98 = vmatpush.msra.mxu0 0.0
    %99 = vmatpush.msra.mxu0 0.0
    %100 = vmatpush.msra.mxu0 0.0
    %101 = vmatpush.msra.mxu0 0.0
    %102 = vmatpush.msra.mxu0 0.0
    %103 = vmatpush.msra.mxu0 0.0
    %104 = vmatpush.msra.mxu0 0.0
    %105 = vmatpush.msra.mxu0 0.0
    %106 = vmatpush.msra.mxu0 0.0
    %107 = vmatpush.msra.mxu0 0.0
    %108 = vmatpush.msra.mxu0 0.0
    %109 = vmatpush.msra.mxu0 0.0
    %110 = vmatpush.msra.mxu0 0.0
    %111 = vmatpush.msra.mxu0 0.0
    %112 = vmatpush.msra.mxu0 %v89
    %113 = vmatpush.msra.mxu0 %v88
    %114 = vmatmul.f32.gmra.mxu0 %v96
    %v115 = vpop.f32.mrf.mxu0
    %v116 = vadd.f32 %v92, %v115
    %117 = vdwg.mxu0
    %v118 = vmax.f32 %v116, 0.0
    %v119 = vld [vmem:[#allocation6] sm:$0xff]
    %v120 = vld [vmem:[#allocation6 + $0x8] sm:$0xff]
    %v121 = vld [vmem:[#allocation6 + $0x10] sm:$0xff]
    %v122 = vld [vmem:[#allocation6 + $0x18] sm:$0xff]
    %v123 = vld [vmem:[#allocation6 + $0x20] sm:$0xff]
    %v124 = vld [vmem:[#allocation6 + $0x28] sm:$0xff]
    %v125 = vld [vmem:[#allocation6 + $0x30] sm:$0xff]
    %v126 = vld [vmem:[#allocation6 + $0x38] sm:$0xff]
    %v127 = vld [vmem:[#allocation6 + $0x40] sm:$0xff]
    %v128 = vld [vmem:[#allocation6 + $0x48] sm:$0xff]
    %v129 = vld [vmem:[#allocation6 + $0x50] sm:$0xff]
    %v130 = vld [vmem:[#allocation6 + $0x58] sm:$0xff]
    %v131 = vld [vmem:[#allocation6 + $0x60] sm:$0xff]
    %v132 = vld [vmem:[#allocation6 + $0x68] sm:$0xff]
    %v133 = vld [vmem:[#allocation6 + $0x70] sm:$0xff]
    %v134 = vld [vmem:[#allocation6 + $0x78] sm:$0xff]
    %v135 = vld [vmem:[%s4] sm:$0x1]
    %v137 = vperm.slane %v135, 0
    %139 = vmatpush.msra.mxu0 %v134
    %140 = vmatpush.msra.mxu0 %v133
    %141 = vmatpush.msra.mxu0 %v132
    %142 = vmatpush.msra.mxu0 %v131
    %143 = vmatpush.msra.mxu0 %v130
    %144 = vmatpush.msra.mxu0 %v129
    %145 = vmatpush.msra.mxu0 %v128
    %146 = vmatpush.msra.mxu0 %v127
    %147 = vmatpush.msra.mxu0 %v126
    %148 = vmatpush.msra.mxu0 %v125
    %149 = vmatpush.msra.mxu0 %v124
    %150 = vmatpush.msra.mxu0 %v123
    %151 = vmatpush.msra.mxu0 %v122
    %152 = vmatpush.msra.mxu0 %v121
    %153 = vmatpush.msra.mxu0 %v120
    %154 = vmatpush.msra.mxu0 %v119
    %155 = vmatmul.f32.gmra.mxu0 %v118
    %v156 = vpop.f32.mrf.mxu0
    %v157 = vadd.f32 %v137, %v156
    %158 = vdwg.mxu0
    %v159 = vmax.f32 %v157, 0.0
    %v160 = vld [vmem:[#allocation7] sm:$0xff]
    %v161 = vld [vmem:[#allocation7 + $0x8] sm:$0xff]
    %v162 = vld [vmem:[#allocation7 + $0x10] sm:$0xff]
    %v163 = vld [vmem:[#allocation7 + $0x18] sm:$0xff]
    %v164 = vld [vmem:[#allocation7 + $0x20] sm:$0xff]
    %v165 = vld [vmem:[#allocation7 + $0x28] sm:$0xff]
    %v166 = vld [vmem:[#allocation7 + $0x30] sm:$0xff]
    %v167 = vld [vmem:[#allocation7 + $0x38] sm:$0xff]
    %v168 = vld [vmem:[#allocation7 + $0x40] sm:$0xff]
    %v169 = vld [vmem:[#allocation7 + $0x48] sm:$0xff]
    %v170 = vld [vmem:[#allocation7 + $0x50] sm:$0xff]
    %v171 = vld [vmem:[#allocation7 + $0x58] sm:$0xff]
    %v172 = vld [vmem:[#allocation7 + $0x60] sm:$0xff]
    %v173 = vld [vmem:[#allocation7 + $0x68] sm:$0xff]
    %v174 = vld [vmem:[#allocation7 + $0x70] sm:$0xff]
    %v175 = vld [vmem:[#allocation7 + $0x78] sm:$0xff]
    %v176 = vld [vmem:[%s6] sm:$0x1]
    %v178 = vperm.slane %v176, 0
    %180 = vmatpush.msra.mxu0 %v175
    %181 = vmatpush.msra.mxu0 %v174
    %182 = vmatpush.msra.mxu0 %v173
    %183 = vmatpush.msra.mxu0 %v172
    %184 = vmatpush.msra.mxu0 %v171
    %185 = vmatpush.msra.mxu0 %v170
    %186 = vmatpush.msra.mxu0 %v169
    %187 = vmatpush.msra.mxu0 %v168
    %188 = vmatpush.msra.mxu0 %v167
    %189 = vmatpush.msra.mxu0 %v166
    %190 = vmatpush.msra.mxu0 %v165
    %191 = vmatpush.msra.mxu0 %v164
    %192 = vmatpush.msra.mxu0 %v163
    %193 = vmatpush.msra.mxu0 %v162
    %194 = vmatpush.msra.mxu0 %v161
    %195 = vmatpush.msra.mxu0 %v160
    %196 = vmatmul.f32.gmra.mxu0 %v159
    %v197 = vpop.f32.mrf.mxu0
    %v198 = vadd.f32 %v178, %v197
    %199 = vdwg.mxu0
    %200 = vmax.xlane.f32.xlu0 %v198
    %v201 = vpop.xlane.xlu0 %200
    %v202 = vsub.f32 %v198, %v201
    %v203 = vmul.f32 %v202, 1.442695
    %v204 = vpow.pop %v203
    %205 = vadd.xlane.f32.xlu0 %v204
    %v206 = vpop.xlane.xlu0 %205
    %v207 = vrcp.pop %v206
    %v208 = vmul.f32 %v206, %v207
    %v209 = vsub.f32 1.0, %v208
    %v210 = vmul.f32 %v207, %v209
    %v211 = vadd.f32 %v207, %v210
    %vm212 = vweird.f32 %v206
    %vm213 = vweird.f32 %v207
    %vm214 = vmor %vm212, %vm213
    %v215 = vsel %vm214, %v207, %v211
    %v216 = vand.u32 2147483647, %v206
    %vm217 = vcmp.eq.f32.partialorder %v216, 8.507059e+37
    %v218 = vand.u32 %v206, 2147483648
    %v219 = vor.u32 1.1754944e-38, %v218
    %v220 = vsel %vm217, %v219, %v215
    %v221 = vmul.f32 %v204, %v220
    %vm222 = vcmask 31744
    %223 = vst.msk [vmem:[%s7] sm:$0xff] %vm222, %v221
    // Predicated region
    $region46: #{tpu_custom_call.1} parent=1 // pred_check
      _
    $region47: #{tpu_custom_call.1} parent=1 // pred_check_branch
      %225 = sbr.rel (0) target = $region49
    $region48: #{tpu_custom_call.1} parent=1 // pred_region
      _
    $region49: #{tpu_custom_call.1} parent=1 // pred_fallthru
      _
    // Predicated region
    $region50: #{tpu_custom_call.1} parent=1 // pred_check
      _
    $region51: #{tpu_custom_call.1} parent=1 // pred_check_branch
      %227 = sbr.rel (0) target = $region53
    $region52: #{tpu_custom_call.1} parent=1 // pred_region
      _
    $region53: #{tpu_custom_call.1} parent=1 // pred_fallthru
      _
    %228 = vsyncpa [#allocation3], 1
    %229 = vsyncpa [#allocation5], 1
    %230 = vsyncpa [#allocation8], 1

</llo_original>
